<compile_context>
chip_gen: v7x
topology: tpu7x:2x2x1
jax: 0.10.0
libtpu: 0.0.40
codegen_flags: <defaults>
</compile_context>

<pallas_src>
import functools

import jax
import jax.numpy as jnp
from jax.experimental import pallas as pl
from jax.experimental.pallas import tpu as pltpu


def _round_up(x, m):
    return (x + m - 1) // m * m


def _sanitize_prev_words(prev_decisions):
    """Flatten previously chosen word ids; sentinel -1 (never matches a lane)."""
    if prev_decisions is None:
        return jnp.full((1,), -1, jnp.int32)
    pw = jnp.asarray(prev_decisions, jnp.int32).reshape(-1)
    if pw.size == 0:
        return jnp.full((1,), -1, jnp.int32)
    return pw


def _beam_step_cand_kernel(prev_ref, t0_ref, lp_ref, bsum_ref, cand_ref, *,
                           tile_v, v_orig, n_prev, diversity_lambda):
    """One vocab tile: fused -1000 / diversity penalty / cand score / t==0 mask."""
    j = pl.program_id(0)
    lp = lp_ref[...]                                   # (B, TILE_V) f32
    shape = lp.shape

    # Global vocab (lane) index of every element in this tile. Reused for both
    # the end-of-vocab suppression and the diversity-penalty compares.
    glane = jax.lax.broadcasted_iota(jnp.int32, shape, 1) + j * tile_v

    # logprobsf[:, V-1] -= 1000  (matches only inside one tile)
    lp = lp - jnp.where(glane == v_orig - 1,
                        jnp.float32(1000.0), jnp.float32(0.0))

    # add_diversity: each occurrence of a previously chosen word subtracts
    # diversity_lambda once. Word ids are SMEM scalars (scalar prefetch); the
    # short unrolled compare loop is nearly-free VPU work in a mem-bound kernel.
    if n_prev > 0:
        counts = jnp.zeros(shape, jnp.float32)
        for k in range(n_prev):
            w = prev_ref[k]
            counts = counts + (glane == w).astype(jnp.float32)
        lp = lp - jnp.float32(diversity_lambda) * counts

    # candidate_logprob = beam_logprobs_sum[q] + logprobsf[q, c]
    cand = lp + bsum_ref[...]                          # (B,1) broadcast add

    # t == 0: only beam row 0 contributes candidates (fused; no extra XLA pass)
    row = jax.lax.broadcasted_iota(jnp.int32, shape, 0)
    cand = jnp.where((t0_ref[0] != 0) & (row > 0), -jnp.inf, cand)

    cand_ref[...] = cand


def beam_step_candidates(logprobs, beam_sum, prev_words, is_t0,
                         diversity_lambda=0.5, tile_v=1024):
    """Pallas hot path. Returns the (B, V) candidate-score array only."""
    B, V = logprobs.shape
    tile_v = max(128, min(_round_up(int(tile_v), 128), _round_up(V, 128)))
    n_tiles = pl.cdiv(V, tile_v)

    prev_words = _sanitize_prev_words(prev_words)
    n_prev = int(prev_words.shape[0])
    t0_arr = jnp.reshape(jnp.asarray(is_t0, jnp.int32), (1,))

    kernel = functools.partial(
        _beam_step_cand_kernel,
        tile_v=tile_v, v_orig=V, n_prev=n_prev,
        diversity_lambda=float(diversity_lambda))

    grid_spec = pltpu.PrefetchScalarGridSpec(
        num_scalar_prefetch=2,                         # prev_words, t0 flag -> SMEM
        grid=(n_tiles,),
        in_specs=[
            pl.BlockSpec((B, tile_v), lambda j, prev, t0: (0, j)),   # logprobs tile
            pl.BlockSpec((B, 1), lambda j, prev, t0: (0, 0)),        # beam_sum (B,1)
        ],
        out_specs=pl.BlockSpec((B, tile_v), lambda j, prev, t0: (0, j)),
    )

    return pl.pallas_call(
        kernel,
        out_shape=jax.ShapeDtypeStruct((B, V), jnp.float32),
        grid_spec=grid_spec,
        compiler_params=pltpu.CompilerParams(
            dimension_semantics=("parallel",)),        # vocab tiles independent
    )(prev_words, t0_arr,
      logprobs.astype(jnp.float32),
      jnp.asarray(beam_sum, jnp.float32).reshape(B, 1))


class CaptionModel:
    """Port of CaptionModel: forward(*args, mode=...) dispatches to self._<mode>.

    The base module has no trainable parameters; subclasses would provide
    get_logprobs_state / the LSTM core used inside beam_search.
    """

    def __init__(self, seq_length=8):
        self.seq_length = seq_length

    def forward(self, *args, **kwargs):
        mode = kwargs.pop('mode', 'forward')
        return getattr(self, '_' + mode)(*args, **kwargs)

    __call__ = forward

    def _forward(self, *args, **kwargs):
        # TODO(synk): the actual captioning forward lives in subclasses
        # (get_logprobs_state, LSTM core); the base class only dispatches.
        raise NotImplementedError("base CaptionModel has no _forward")

    def _beam_step(self, logprobs, beam_logprobs_sum, prev_decisions, t,
                   diversity_lambda=0.5, tile_v=1024):
        """One beam_search scoring step: returns (c, q, p, r) for the top beams."""
        B, V = logprobs.shape
        prev_words = _sanitize_prev_words(prev_decisions)

        cand = beam_step_candidates(logprobs, beam_logprobs_sum, prev_words,
                                    is_t0=(t == 0),
                                    diversity_lambda=diversity_lambda,
                                    tile_v=tile_v)

        # TODO(synk): PyTorch's stable descending sort + python-dict candidate
        # bookkeeping / beam & state re-indexing has no clean Pallas equivalent;
        # global top-B over (B, V) candidates is equivalent and stays in JAX.
        top_p, top_idx = jax.lax.top_k(cand.reshape(-1), B)   # B == bdash
        q = top_idx // V                                      # source beam
        c = top_idx % V                                       # chosen word
        # local_unaug_logprob recovered without a (B, V) unaug array:
        #   unaug[q, c] = cand[q, c] - beam_sum[q] + lambda * count_prev(c)
        cnt = (prev_words[None, :] == c[:, None]).sum(axis=-1).astype(jnp.float32)
        bsum = jnp.asarray(beam_logprobs_sum, jnp.float32).reshape(-1)
        r = top_p - bsum[q] + jnp.float32(diversity_lambda) * cnt
        return c, q, top_p, r


if __name__ == "__main__":
    key = jax.random.PRNGKey(0)
    bdash, vocab = 8, 200                       # beam width, vocab (ragged tile path)
    lam = 0.5
    k1, k2, k3 = jax.random.split(key, 3)

    logprobs = jax.nn.log_softmax(
        jax.random.normal(k1, (bdash, vocab), dtype=jnp.float32), axis=-1)
    beam_sum = 0.1 * jax.random.normal(k2, (bdash,), dtype=jnp.float32)
    prev_decisions = jax.random.randint(k3, (1, bdash), 0, vocab)   # one prev group

    model = CaptionModel(seq_length=8)

    # t >= 1 path (with diversity penalty); tile_v=128 -> 2-tile vocab grid.
    c, q, p, r = model(logprobs, beam_sum, prev_decisions, 1,
                       diversity_lambda=lam, tile_v=128, mode='beam_step')
    jax.block_until_ready((c, q, p, r))

    # ---- pure-JAX reference ------------------------------------------------
    prev_flat = prev_decisions.reshape(-1)
    ref_lp = logprobs.at[:, vocab - 1].add(-1000.0)          # unaug (after -1000)
    counts = jnp.zeros((vocab,), jnp.float32).at[prev_flat].add(1.0)
    ref_aug = ref_lp - lam * counts[None, :]
    ref_cand = ref_aug + beam_sum[:, None]

    cand_k = beam_step_candidates(logprobs, beam_sum, prev_flat, False,
                                  diversity_lambda=lam, tile_v=128)
    jax.block_until_ready(cand_k)
    assert jnp.allclose(cand_k, ref_cand, atol=1e-5)

    ref_p, ref_idx = jax.lax.top_k(ref_cand.reshape(-1), bdash)
    ref_q, ref_c = ref_idx // vocab, ref_idx % vocab
    assert jnp.array_equal(q, ref_q) and jnp.array_equal(c, ref_c)
    assert jnp.allclose(p, ref_p, atol=1e-5)
    assert jnp.allclose(r, ref_lp[ref_q, ref_c], atol=1e-4)

    # t == 0 path: only beam row 0 contributes (mask fused in-kernel).
    c0, q0, p0, r0 = model(logprobs, beam_sum, prev_decisions, 0,
                           diversity_lambda=lam, tile_v=128, mode='beam_step')
    jax.block_until_ready((c0, q0, p0, r0))
    ref0 = jnp.where((jnp.arange(bdash) == 0)[:, None], ref_cand, -jnp.inf)
    ref_p0, ref_idx0 = jax.lax.top_k(ref0.reshape(-1), bdash)
    assert bool(jnp.all(q0 == 0))
    assert jnp.array_equal(c0, ref_idx0 % vocab)
    assert jnp.allclose(p0, ref_p0, atol=1e-5)
    assert jnp.allclose(r0, ref_lp[q0, c0], atol=1e-4)

    print("KERNEL_OK")
</pallas_src>

<mosaic_0001>
module attributes {stable_mosaic.version = 11 : i64} {
  func.func @_beam_step_cand_kernel(%arg0: i32, %arg1: memref<8xi32, #tpu.memory_space<smem>>, %arg2: memref<1xi32, #tpu.memory_space<smem>>, %arg3: memref<8x128xf32, #tpu.memory_space<vmem>>, %arg4: memref<8x1xf32, #tpu.memory_space<vmem>>, %arg5: memref<8x128xf32, #tpu.memory_space<vmem>>) attributes {dimension_semantics = [#tpu.dimension_semantics<parallel>], iteration_bounds = array<i64: 2>, scalar_prefetch = 2 : i64, scratch_operands = 0 : i64, tpu.core_type = #tpu.core_type<tc>, window_params = [{transform_indices = @transform_0, window_bounds = array<i64: 8, 128>}, {pipeline_mode = #tpu.pipeline_mode<synchronous>, transform_indices = @transform_1, window_bounds = array<i64: 8, 1>}, {transform_indices = @transform_2, window_bounds = array<i64: 8, 128>}]} {
    %c0 = arith.constant 0 : index
    %c0_0 = arith.constant 0 : index
    %0 = vector.load %arg3[%c0, %c0_0] : memref<8x128xf32, #tpu.memory_space<vmem>>, vector<8x128xf32>
    %1 = tpu.iota {dimensions = array<i32: 1>} : vector<8x128xi32>
    %c128_i32 = arith.constant 128 : i32
    %2 = arith.muli %arg0, %c128_i32 : i32
    %3 = vector.broadcast %2 : i32 to vector<8x128xi32>
    %4 = arith.addi %1, %3 : vector<8x128xi32>
    %c199_i32 = arith.constant 199 : i32
    %5 = vector.broadcast %c199_i32 : i32 to vector<8x128xi32>
    %6 = arith.cmpi eq, %4, %5 : vector<8x128xi32>
    %cst = arith.constant 1.000000e+03 : f32
    %cst_1 = arith.constant 0.000000e+00 : f32
    %7 = vector.broadcast %cst : f32 to vector<8x128xf32>
    %8 = vector.broadcast %cst_1 : f32 to vector<8x128xf32>
    %9 = arith.select %6, %7, %8 : vector<8x128xi1>, vector<8x128xf32>
    %10 = arith.subf %0, %9 : vector<8x128xf32>
    %cst_2 = arith.constant 0.000000e+00 : f32
    %11 = vector.broadcast %cst_2 : f32 to vector<8x128xf32>
    %c0_3 = arith.constant 0 : index
    %12 = memref.load %arg1[%c0_3] : memref<8xi32, #tpu.memory_space<smem>>
    %13 = vector.broadcast %12 : i32 to vector<8x128xi32>
    %14 = arith.cmpi eq, %4, %13 : vector<8x128xi32>
    %15 = arith.extui %14 : vector<8x128xi1> to vector<8x128xi32>
    %16 = arith.sitofp %15 : vector<8x128xi32> to vector<8x128xf32>
    %17 = arith.addf %11, %16 : vector<8x128xf32>
    %c1 = arith.constant 1 : index
    %18 = memref.load %arg1[%c1] : memref<8xi32, #tpu.memory_space<smem>>
    %19 = vector.broadcast %18 : i32 to vector<8x128xi32>
    %20 = arith.cmpi eq, %4, %19 : vector<8x128xi32>
    %21 = arith.extui %20 : vector<8x128xi1> to vector<8x128xi32>
    %22 = arith.sitofp %21 : vector<8x128xi32> to vector<8x128xf32>
    %23 = arith.addf %17, %22 : vector<8x128xf32>
    %c2 = arith.constant 2 : index
    %24 = memref.load %arg1[%c2] : memref<8xi32, #tpu.memory_space<smem>>
    %25 = vector.broadcast %24 : i32 to vector<8x128xi32>
    %26 = arith.cmpi eq, %4, %25 : vector<8x128xi32>
    %27 = arith.extui %26 : vector<8x128xi1> to vector<8x128xi32>
    %28 = arith.sitofp %27 : vector<8x128xi32> to vector<8x128xf32>
    %29 = arith.addf %23, %28 : vector<8x128xf32>
    %c3 = arith.constant 3 : index
    %30 = memref.load %arg1[%c3] : memref<8xi32, #tpu.memory_space<smem>>
    %31 = vector.broadcast %30 : i32 to vector<8x128xi32>
    %32 = arith.cmpi eq, %4, %31 : vector<8x128xi32>
    %33 = arith.extui %32 : vector<8x128xi1> to vector<8x128xi32>
    %34 = arith.sitofp %33 : vector<8x128xi32> to vector<8x128xf32>
    %35 = arith.addf %29, %34 : vector<8x128xf32>
    %c4 = arith.constant 4 : index
    %36 = memref.load %arg1[%c4] : memref<8xi32, #tpu.memory_space<smem>>
    %37 = vector.broadcast %36 : i32 to vector<8x128xi32>
    %38 = arith.cmpi eq, %4, %37 : vector<8x128xi32>
    %39 = arith.extui %38 : vector<8x128xi1> to vector<8x128xi32>
    %40 = arith.sitofp %39 : vector<8x128xi32> to vector<8x128xf32>
    %41 = arith.addf %35, %40 : vector<8x128xf32>
    %c5 = arith.constant 5 : index
    %42 = memref.load %arg1[%c5] : memref<8xi32, #tpu.memory_space<smem>>
    %43 = vector.broadcast %42 : i32 to vector<8x128xi32>
    %44 = arith.cmpi eq, %4, %43 : vector<8x128xi32>
    %45 = arith.extui %44 : vector<8x128xi1> to vector<8x128xi32>
    %46 = arith.sitofp %45 : vector<8x128xi32> to vector<8x128xf32>
    %47 = arith.addf %41, %46 : vector<8x128xf32>
    %c6 = arith.constant 6 : index
    %48 = memref.load %arg1[%c6] : memref<8xi32, #tpu.memory_space<smem>>
    %49 = vector.broadcast %48 : i32 to vector<8x128xi32>
    %50 = arith.cmpi eq, %4, %49 : vector<8x128xi32>
    %51 = arith.extui %50 : vector<8x128xi1> to vector<8x128xi32>
    %52 = arith.sitofp %51 : vector<8x128xi32> to vector<8x128xf32>
    %53 = arith.addf %47, %52 : vector<8x128xf32>
    %c7 = arith.constant 7 : index
    %54 = memref.load %arg1[%c7] : memref<8xi32, #tpu.memory_space<smem>>
    %55 = vector.broadcast %54 : i32 to vector<8x128xi32>
    %56 = arith.cmpi eq, %4, %55 : vector<8x128xi32>
    %57 = arith.extui %56 : vector<8x128xi1> to vector<8x128xi32>
    %58 = arith.sitofp %57 : vector<8x128xi32> to vector<8x128xf32>
    %59 = arith.addf %53, %58 : vector<8x128xf32>
    %cst_4 = arith.constant 5.000000e-01 : f32
    %60 = vector.broadcast %cst_4 : f32 to vector<8x128xf32>
    %61 = arith.mulf %60, %59 : vector<8x128xf32>
    %62 = arith.subf %10, %61 : vector<8x128xf32>
    %c0_5 = arith.constant 0 : index
    %c0_6 = arith.constant 0 : index
    %63 = vector.load %arg4[%c0_5, %c0_6] : memref<8x1xf32, #tpu.memory_space<vmem>>, vector<8x1xf32>
    %64 = vector.broadcast %63 : vector<8x1xf32> to vector<8x128xf32>
    %65 = arith.addf %62, %64 : vector<8x128xf32>
    %66 = tpu.iota {dimensions = array<i32: 0>} : vector<8x128xi32>
    %c0_7 = arith.constant 0 : index
    %67 = memref.load %arg2[%c0_7] : memref<1xi32, #tpu.memory_space<smem>>
    %c0_i32 = arith.constant 0 : i32
    %68 = arith.cmpi ne, %67, %c0_i32 : i32
    %c0_i32_8 = arith.constant 0 : i32
    %69 = vector.broadcast %c0_i32_8 : i32 to vector<8x128xi32>
    %70 = arith.cmpi sgt, %66, %69 : vector<8x128xi32>
    %71 = vector.broadcast %68 : i1 to vector<8x128xi1>
    %72 = arith.andi %71, %70 : vector<8x128xi1>
    %cst_9 = arith.constant 0xFF800000 : f32
    %73 = vector.broadcast %cst_9 : f32 to vector<8x128xf32>
    %74 = arith.select %72, %73, %65 : vector<8x128xi1>, vector<8x128xf32>
    %c0_10 = arith.constant 0 : index
    %c0_11 = arith.constant 0 : index
    %75 = vector.load %arg5[%c0_10, %c0_11] : memref<8x128xf32, #tpu.memory_space<vmem>>, vector<8x128xf32>
    tpu.vector_store %arg5[%c0_10, %c0_11], %74 {strides = array<i32>} : memref<8x128xf32, #tpu.memory_space<vmem>>, vector<8x128xf32>,
    return
  }
  func.func @transform_0(%arg0: i32, %arg1: memref<8xi32, #tpu.memory_space<smem>>, %arg2: memref<1xi32, #tpu.memory_space<smem>>) -> (i32, i32) {
    %c0_i32 = arith.constant 0 : i32
    %c0_i32_0 = arith.constant 0 : i32
    return %c0_i32, %arg0 : i32, i32
  }
  func.func @transform_1(%arg0: i32, %arg1: memref<8xi32, #tpu.memory_space<smem>>, %arg2: memref<1xi32, #tpu.memory_space<smem>>) -> (i32, i32) {
    %c0_i32 = arith.constant 0 : i32
    %c0_i32_0 = arith.constant 0 : i32
    %c0_i32_1 = arith.constant 0 : i32
    return %c0_i32, %c0_i32_0 : i32, i32
  }
  func.func @transform_2(%arg0: i32, %arg1: memref<8xi32, #tpu.memory_space<smem>>, %arg2: memref<1xi32, #tpu.memory_space<smem>>) -> (i32, i32) {
    %c0_i32 = arith.constant 0 : i32
    %c0_i32_0 = arith.constant 0 : i32
    return %c0_i32, %arg0 : i32, i32
  }
}

</mosaic_0001>

<llo_original>
// kernel: tpu_custom_call.1
$region0: #{tpu_custom_call.1}
  #allocation0 [shape = 'u32[]', space=smem, size = 0x4, offset = 0x4, fixed_abs, tag = 'smem constant byte address 0x4 - core index']
  #allocation1 [shape = 'u32[144,128]{1,0:T(1,128)}', space=vmem, size = 0x12000, scoped, tag = 'internal scratch']
  #allocation2 [shape = 's32[1]{0}', space=sflag, size = 0x4, scoped, tag = 'scoped memory for tpu_custom_call.1']
  #allocation3 [shape = 'u8[512]{0}', space=smem, size = 0x200, scoped, tag = 'prefetched SMEM operand 0']
  #allocation4 [shape = 's32[1]{0:T(128)S(6)}', space=smem, size = 0x200, scoped, tag = 'prefetched SMEM operand 1']
  %s0 = inlined_call_operand.hbm [shape: s32[8], index: 0, kind: input, shape index: {}]
  %s1 = inlined_call_operand.<no memory space> [shape: s32[1], index: 1, kind: input, shape index: {}]
  %s2 = inlined_call_operand.vmem [shape: f32[8,200], index: 2, kind: input, shape index: {}]
  %s3 = inlined_call_operand.vmem [shape: f32[8,1], index: 3, kind: input, shape index: {}]
  %s4 = inlined_call_operand.hbm [shape: f32[8,200], index: 4, kind: output, shape index: {}]
  %s5 = sld [smem:[#allocation0]]
  $region41: #{tpu_custom_call.1} parent=0
    _
  %s7 = ssub.s32 1, %s5
  %s8 = scalar_select 0, %s7, %s5
  %10 = dma.hbm_to_smem %s0, 16, [#allocation3], [#allocation2]
  %11 = sst [smem:[#allocation4]] %s1
  %12 = dma.done [#allocation2], 16
  %13 = sfence
  $region1: #{tpu_custom_call.1} parent=0
    #allocation5 [shape = 'u8[8192]{0}', space=vmem, size = 0x2000, scoped, tag = 'output window, operand 0']
    #allocation6 [shape = 's32[2]{0}', space=sflag, size = 0x8, scoped, tag = 'scoped memory for tpu_custom_call.1']
    %14 = vsyncpa [#allocation6], 0
    %s15 = scalar_lea.sflag [#allocation6], 1
    %16 = vsyncpa %s15, 0
    loop: start=0, step=1, limit=4
    $region2: #{tpu_custom_call.1} parent=1 // loop_pre_header
      _
    $region3: #{tpu_custom_call.1} parent=1 // loop_header
      %s18 = sphi 0, %s22
      %p19 = scmp.ge.s32.totalorder %s18, 4
      %s28 = sphi 0, %s30
      %s31 = sphi 0, %s28
      %s32 = sphi 0, %s31
      %s48 = sphi 0, %s32
      %s52 = sphi 0, %s52
      %s54 = sphi 0, %s52
      %s55 = sphi 0, %s54
      %s69 = sphi 0, %s55
      %s75 = sphi 0, %s77
      %s78 = sphi 0, %s75
      %s79 = sphi 0, %s78
      %s95 = sphi 0, %s79
    $region4: #{tpu_custom_call.1} parent=1 // loop_header_branch
      %21 = sbr.rel (%p19) target = $region8
    $region5: #{tpu_custom_call.1} parent=1 // loop_body
      %s23 = ssub.s32 %s18, 1
      %s24 = ssub.s32 %s18, 2
      %s25 = sadd.s32 %s18, 1
      %s26 = ssub.s32 %s18, %s25
      %p27 = scmp.eq.s32.totalorder %s26, 0
      %s29 = sadd.s32 %s28, 1
      %s30 = scalar_select %p27, %s28, %s29
      %p33 = pneg %p27
      %p34 = scmp.eq.s32.totalorder %s18, 1
      %p35 = por %p33, %p34
      %p36 = scmp.ne.s32.totalorder %s28, %s31
      %p37 = scmp.eq.s32.totalorder %s18, 0
      %p38 = por %p36, %p37
      %p39 = scmp.ne.s32.totalorder %s28, %s31
      %p40 = scmp.eq.s32.totalorder %s23, 1
      %p41 = por %p39, %p40
      %p42 = scmp.ne.s32.totalorder %s31, %s32
      %p43 = scmp.eq.s32.totalorder %s23, 0
      %p44 = por %p42, %p43
      %p45 = scmp.ne.s32.totalorder %s31, %s32
      %p46 = scmp.eq.s32.totalorder %s24, 1
      %p47 = por %p45, %p46
      %p49 = scmp.ne.s32.totalorder %s32, %s48
      %p50 = scmp.eq.s32.totalorder %s24, 0
      %p51 = por %p49, %p50
      %s53 = sadd.s32 %s52, 1
      %p56 = scmp.eq.s32.totalorder %s18, 1
      %p57 = scmp.ne.s32.totalorder %s52, %s54
      %p58 = scmp.eq.s32.totalorder %s18, 0
      %p59 = por %p57, %p58
      %p60 = scmp.ne.s32.totalorder %s52, %s54
      %p61 = scmp.eq.s32.totalorder %s23, 1
      %p62 = por %p60, %p61
      %p63 = scmp.ne.s32.totalorder %s54, %s55
      %p64 = scmp.eq.s32.totalorder %s23, 0
      %p65 = por %p63, %p64
      %p66 = scmp.ne.s32.totalorder %s54, %s55
      %p67 = scmp.eq.s32.totalorder %s24, 1
      %p68 = por %p66, %p67
      %p70 = scmp.ne.s32.totalorder %s55, %s69
      %p71 = scmp.eq.s32.totalorder %s24, 0
      %p72 = por %p70, %p71
      %s73 = ssub.s32 %s18, %s25
      %p74 = scmp.eq.s32.totalorder %s73, 0
      %s76 = sadd.s32 %s75, 1
      %s77 = scalar_select %p74, %s75, %s76
      %p80 = pneg %p74
      %p81 = scmp.eq.s32.totalorder %s18, 1
      %p82 = por %p80, %p81
      %p83 = scmp.ne.s32.totalorder %s75, %s78
      %p84 = scmp.eq.s32.totalorder %s18, 0
      %p85 = por %p83, %p84
      %p86 = scmp.ne.s32.totalorder %s75, %s78
      %p87 = scmp.eq.s32.totalorder %s23, 1
      %p88 = por %p86, %p87
      %p89 = scmp.ne.s32.totalorder %s78, %s79
      %p90 = scmp.eq.s32.totalorder %s23, 0
      %p91 = por %p89, %p90
      %p92 = scmp.ne.s32.totalorder %s78, %s79
      %p93 = scmp.eq.s32.totalorder %s24, 1
      %p94 = por %p92, %p93
      %p96 = scmp.ne.s32.totalorder %s79, %s95
      %p97 = scmp.eq.s32.totalorder %s24, 0
      %p98 = por %p96, %p97
      %p99 = scmp.le.s32.totalorder 1, %s18
      %p100 = scmp.lt.s32.totalorder %s18, 3
      %p101 = pnand %p99, %p100
      %p102 = pneg %p101
      // Predicated region
      $region9: #{tpu_custom_call.1} parent=5 // pred_check
        _
      $region10: #{tpu_custom_call.1} parent=5 // pred_check_branch
        %104 = sbr.rel (%p101) target = $region12
      $region11: #{tpu_custom_call.1} parent=5 // pred_region
        %s105 = ssub.s32 %s18, 1
        // Predicated region
        $region13: #{tpu_custom_call.1} parent=11 // pred_check
          %p106 = pneg %p65
        $region14: #{tpu_custom_call.1} parent=11 // pred_check_branch
          %108 = sbr.rel (%p106) target = $region16
        $region15: #{tpu_custom_call.1} parent=11 // pred_region
          _
        $region16: #{tpu_custom_call.1} parent=11 // pred_fallthru
          _
      $region12: #{tpu_custom_call.1} parent=5 // pred_fallthru
        _
      %p109 = scmp.lt.s32.totalorder %s18, 2
      // Predicated region
      $region17: #{tpu_custom_call.1} parent=5 // pred_check
        %p110 = pneg %p109
      $region18: #{tpu_custom_call.1} parent=5 // pred_check_branch
        %112 = sbr.rel (%p110) target = $region20
      $region19: #{tpu_custom_call.1} parent=5 // pred_region
        // Predicated region
        $region21: #{tpu_custom_call.1} parent=19 // pred_check
          %p113 = pneg %p38
        $region22: #{tpu_custom_call.1} parent=19 // pred_check_branch
          %115 = sbr.rel (%p113) target = $region24
        $region23: #{tpu_custom_call.1} parent=19 // pred_region
          %p116 = scmp.lt.s32.totalorder %s18, 1
          %s117 = scalar_select %p116, %s18, 1
          %s118 = smul.addr %s117, 8
          %s119 = scalar_lea.vmem %s2, %s118
        $region24: #{tpu_custom_call.1} parent=19 // pred_fallthru
          _
      $region20: #{tpu_custom_call.1} parent=5 // pred_fallthru
        _
      %p120 = scmp.le.s32.totalorder 1, %s18
      %p121 = scmp.lt.s32.totalorder %s18, 3
      %p122 = pnand %p120, %p121
      %p123 = pneg %p122
      // Predicated region
      $region25: #{tpu_custom_call.1} parent=5 // pred_check
        _
      $region26: #{tpu_custom_call.1} parent=5 // pred_check_branch
        %125 = sbr.rel (%p122) target = $region28
      $region27: #{tpu_custom_call.1} parent=5 // pred_region
        %s126 = ssub.s32 %s18, 1
        %p127 = scmp.lt.s32.totalorder %s23, 1
        %s128 = scalar_select %p127, %s23, 1
        %s129 = smul.addr %s128, 8
        %s130 = scalar_lea.vmem %s2, %s129
        %p131 = pneg %p44
        %p132 = pneg %p41
        %p133 = pneg %p65
        %p134 = pneg %p62
        %p135 = pneg %p91
        %p136 = pneg %p88
        %s137 = sand.u32 %s78, 1
        %s138 = scalar_lea.sflag [#allocation6], %s137
        %s139 = sand.u32 %s78, 1
        %s140 = smul.addr %s139, 8
        %s141 = scalar_lea.vmem [#allocation5], %s140
        %p142 = scmp.lt.s32.totalorder %s23, 1
        %s143 = scalar_select %p142, %s23, 1
        %s144 = smul.addr %s143, 8
        %s145 = scalar_lea.vmem %s2, %s144
        %v146 = vld [vmem:[%s145] sm:$0xff]
        %v147 = vlaneseq
        %v148 = vand.u32 %v147, 127
        %s149 = smul.u32 %s23, 128
        %v150 = vstv %s149
        %v151 = vadd.s32 %v148, %v150
        %vm152 = vcmp.eq.s32.totalorder %v151, 199
        %v153 = vsel %vm152, 1000.0, 0.0
        %v154 = vsub.f32 %v146, %v153
        %s155 = sld [smem:[#allocation3]]
        %v156 = vstv %s155
        %vm157 = vcmp.eq.s32.totalorder %v151, %v156
        %v158 = vsel %vm157, 1, 0
        %v159 = vcvt.s32.f32 %v158
        %v160 = vadd.f32 %v159, 0.0
        %s161 = sld [smem:[#allocation3 + $0x1]]
        %v162 = vstv %s161
        %vm163 = vcmp.eq.s32.totalorder %v151, %v162
        %v164 = vsel %vm163, 1, 0
        %v165 = vcvt.s32.f32 %v164
        %v166 = vadd.f32 %v160, %v165
        %s167 = sld [smem:[#allocation3 + $0x2]]
        %v168 = vstv %s167
        %vm169 = vcmp.eq.s32.totalorder %v151, %v168
        %v170 = vsel %vm169, 1, 0
        %v171 = vcvt.s32.f32 %v170
        %v172 = vadd.f32 %v166, %v171
        %s173 = sld [smem:[#allocation3 + $0x3]]
        %v174 = vstv %s173
        %vm175 = vcmp.eq.s32.totalorder %v151, %v174
        %v176 = vsel %vm175, 1, 0
        %v177 = vcvt.s32.f32 %v176
        %v178 = vadd.f32 %v172, %v177
        %s179 = sld [smem:[#allocation3 + $0x4]]
        %v180 = vstv %s179
        %vm181 = vcmp.eq.s32.totalorder %v151, %v180
        %v182 = vsel %vm181, 1, 0
        %v183 = vcvt.s32.f32 %v182
        %v184 = vadd.f32 %v178, %v183
        %s185 = sld [smem:[#allocation3 + $0x5]]
        %v186 = vstv %s185
        %vm187 = vcmp.eq.s32.totalorder %v151, %v186
        %v188 = vsel %vm187, 1, 0
        %v189 = vcvt.s32.f32 %v188
        %v190 = vadd.f32 %v184, %v189
        %s191 = sld [smem:[#allocation3 + $0x6]]
        %v192 = vstv %s191
        %vm193 = vcmp.eq.s32.totalorder %v151, %v192
        %v194 = vsel %vm193, 1, 0
        %v195 = vcvt.s32.f32 %v194
        %v196 = vadd.f32 %v190, %v195
        %s197 = sld [smem:[#allocation3 + $0x7]]
        %v198 = vstv %s197
        %vm199 = vcmp.eq.s32.totalorder %v151, %v198
        %v200 = vsel %vm199, 1, 0
        %v201 = vcvt.s32.f32 %v200
        %v202 = vadd.f32 %v196, %v201
        %v203 = vmul.f32 %v202, 0.5
        %v204 = vsub.f32 %v154, %v203
        %v205 = vld [vmem:[%s3] sm:$0xff]
        %207 = vset.pattern.permute.xlu0 0
        %208 = vperm.xlu0 %207, %v205
        %v209 = vpop.permute.xlu0 %208
        %v211 = vadd.f32 %v204, %v209
        %v212 = vlaneseq
        %v213 = vshrl.u32 %v212, 7
        %s214 = sld [smem:[#allocation4]]
        %p215 = scmp.ne.s32.totalorder %s214, 0
        %vm216 = vcmp.gt.s32.totalorder %v213, 0
        %s217 = scalar_select %p215, 1, 0
        %v218 = vstv %s217
        %vm219 = vcmp.eq.s32.totalorder %v218, 1
        %vm220 = vmand %vm219, %vm216
        %v221 = vsel %vm220, -inf, %v211
        %222 = vst [vmem:[%s141] sm:$0xff] %v221
        %s223 = sand.u32 %s78, 1
        %s224 = scalar_lea.sflag [#allocation6], %s223
        %s225 = sand.u32 %s78, 1
        %s226 = smul.addr %s225, 8
        %s227 = scalar_lea.vmem [#allocation5], %s226
        // Predicated region
        $region29: #{tpu_custom_call.1} parent=27 // pred_check
          %p228 = pneg %p88
        $region30: #{tpu_custom_call.1} parent=27 // pred_check_branch
          %230 = sbr.rel (%p228) target = $region32
        $region31: #{tpu_custom_call.1} parent=27 // pred_region
          %s232 = ssub.s32 128, 128
          %233 = vsyncadd %s224, %s232
          %s234 = smul.addr %s23, 128
          %s235 = scalar_lea.hbm %s4, %s234
          %s237 = sshll.u32 %s227, 4
          %s238 = int_to_ptr.vmem [resolvable:$true] %s237
          %240 = dma.vmem_to_hbm [thread:$0]  %s238, 128, %s235, %s224
        $region32: #{tpu_custom_call.1} parent=27 // pred_fallthru
          _
      $region28: #{tpu_custom_call.1} parent=5 // pred_fallthru
        _
      %p241 = scmp.le.s32.totalorder 2, %s18
      // Predicated region
      $region33: #{tpu_custom_call.1} parent=5 // pred_check
        %p242 = pneg %p241
      $region34: #{tpu_custom_call.1} parent=5 // pred_check_branch
        %244 = sbr.rel (%p242) target = $region36
      $region35: #{tpu_custom_call.1} parent=5 // pred_region
        %s245 = ssub.s32 %s18, 2
        // Predicated region
        $region37: #{tpu_custom_call.1} parent=35 // pred_check
          %p246 = pneg %p94
        $region38: #{tpu_custom_call.1} parent=35 // pred_check_branch
          %248 = sbr.rel (%p246) target = $region40
        $region39: #{tpu_custom_call.1} parent=35 // pred_region
          %s249 = sand.u32 %s79, 1
          %s250 = scalar_lea.sflag [#allocation6], %s249
          %s251 = sand.u32 %s79, 1
          %s252 = smul.addr %s251, 8
          %s253 = scalar_lea.vmem [#allocation5], %s252
          %254 = dma.done %s250, 128
        $region40: #{tpu_custom_call.1} parent=35 // pred_fallthru
          _
      $region36: #{tpu_custom_call.1} parent=5 // pred_fallthru
        _
    $region6: #{tpu_custom_call.1} parent=1 // loop_footer
      %s22 = sadd.s32 1, %s18
    $region7: #{tpu_custom_call.1} parent=1 // loop_footer_branch
      %17 = sbr.rel target = $region3
    $region8: #{tpu_custom_call.1} parent=1 // loop_exit
      _
    %255 = vsyncpa [#allocation6], 1
    %s256 = scalar_lea.sflag [#allocation6], 1
    %257 = vsyncpa %s256, 1

</llo_original>
